<compile_context>
chip_gen: v7x
topology: tpu7x:2x2x1
jax: 0.10.0
libtpu: 0.0.40
codegen_flags: <defaults>
</compile_context>

<pallas_src>
import functools

import jax
import jax.numpy as jnp
from jax.experimental import pallas as pl
from jax.experimental.pallas import tpu as pltpu


def _log_noise_filter_kernel(x_ref, lower_ref, upper_ref, *out_refs, eps):
    x = x_ref[...]
    xc = jnp.maximum(x.astype(jnp.float32), eps)          # clamp(min=eps) in f32
    # (|log(xc) - mean| / std > k)  <=>  xc < exp(mean - k*std)  or  xc > exp(mean + k*std)
    keep = jnp.logical_or(xc < lower_ref[...], xc > upper_ref[...])
    out_refs[0][...] = x * keep.astype(x.dtype)            # filtered = features * mask
    if len(out_refs) > 1:
        out_refs[1][...] = keep.astype(out_refs[1].dtype)  # binary salience mask


def _round_up(x, m):
    return ((x + m - 1) // m) * m


def _pick_lane_width(n_rows, feat, cap=2048):
    """Largest L = reps*feat with reps | n_rows and L <= cap, preferring L % 128 == 0."""
    best = feat
    best_dense = None
    for reps in range(1, max(1, cap // feat) + 1):
        if n_rows % reps:
            continue
        L = reps * feat
        best = L
        if L % 128 == 0:
            best_dense = L
    return best_dense if best_dense is not None else best


def log_noise_filter(features, noise_mean, noise_std, *, k=3.0, eps=1e-8,
                     with_mask=True, mask_dtype=None,
                     target_block_bytes=4 * 1024 * 1024):
    """features: (B, S, F); noise_mean/noise_std: (F,) or (1,).

    Returns (filtered, mask) matching the PyTorch module, or just `filtered`
    when with_mask=False (saves one full HBM output stream).
    """
    B, S, F = features.shape
    dtype = features.dtype
    mask_dtype = dtype if mask_dtype is None else jnp.dtype(mask_dtype)
    itemsize = jnp.dtype(dtype).itemsize
    mask_itemsize = jnp.dtype(mask_dtype).itemsize if with_mask else 0

    # Exp-space thresholds in f32 (std must be > 0, as the module guarantees).
    mean = jnp.broadcast_to(noise_mean.astype(jnp.float32).reshape(-1), (F,))
    std = jnp.broadcast_to(noise_std.astype(jnp.float32).reshape(-1), (F,))
    lower = jnp.exp(mean - k * std)
    upper = jnp.exp(mean + k * std)

    # Lane-dense 2D view: (rows, L) with L = reps*F, reps | B*S  -> reshape is free.
    n_rows = B * S
    L = _pick_lane_width(n_rows, F)
    reps = L // F
    rows = n_rows // reps
    x2d = features.reshape(rows, L)
    lower_row = jnp.tile(lower, reps).reshape(1, L)
    upper_row = jnp.tile(upper, reps).reshape(1, L)

    # Row tile sized from the actual element size; keep >= ~8 grid blocks so both
    # TensorCores (v7x) stay busy and the DMA pipeline has work to overlap.
    tm = max(8, (target_block_bytes // (L * itemsize)) // 8 * 8)
    tm = min(tm, max(8, _round_up(pl.cdiv(rows, 8), 8)))
    if rows <= tm:
        tm = rows                              # single full block (block dim == array dim)
    grid = (pl.cdiv(rows, tm),)                # partial last block handled by Pallas

    # VMEM budget: double-buffered input + outputs + resident threshold rows + slack.
    tile_bytes = tm * L * (2 * itemsize + mask_itemsize)
    vmem_needed = 2 * tile_bytes + 4 * L * 4 + (1 << 20)
    vmem_limit = int(min(48 * 1024 * 1024, max(32 * 1024 * 1024, vmem_needed)))

    kernel = functools.partial(_log_noise_filter_kernel, eps=float(eps))

    row_spec = pl.BlockSpec((tm, L), lambda i: (i, 0))
    thr_spec = pl.BlockSpec((1, L), lambda i: (0, 0))
    if with_mask:
        out_shape = (jax.ShapeDtypeStruct((rows, L), dtype),
                     jax.ShapeDtypeStruct((rows, L), mask_dtype))
        out_specs = (row_spec, row_spec)
    else:
        out_shape = jax.ShapeDtypeStruct((rows, L), dtype)
        out_specs = row_spec

    n_elem = rows * L
    cost = pl.CostEstimate(
        flops=5 * n_elem,
        transcendentals=0,
        bytes_accessed=n_elem * (2 * itemsize + mask_itemsize) + 2 * L * 4,
    )

    out = pl.pallas_call(
        kernel,
        out_shape=out_shape,
        grid_spec=pltpu.PrefetchScalarGridSpec(
            num_scalar_prefetch=0,
            grid=grid,
            in_specs=[row_spec, thr_spec, thr_spec],
            out_specs=out_specs,
        ),
        compiler_params=pltpu.CompilerParams(
            dimension_semantics=("parallel",),
            vmem_limit_bytes=vmem_limit,
        ),
        cost_estimate=cost,
    )(x2d, lower_row, upper_row)

    if with_mask:
        filt2d, mask2d = out
        return filt2d.reshape(B, S, F), mask2d.reshape(B, S, F)
    return out.reshape(B, S, F)


def log_noise_filter_ref(features, noise_mean, noise_std, *, k=3.0, eps=1e-8):
    """Pure-JAX reference matching the PyTorch forward (log-space)."""
    F = features.shape[-1]
    log_features = jnp.log(jnp.maximum(features, eps))
    mean = jnp.broadcast_to(noise_mean.reshape(-1), (F,)).reshape(1, 1, -1)
    std = jnp.broadcast_to(noise_std.reshape(-1), (F,)).reshape(1, 1, -1)
    deviation = jnp.abs(log_features - mean) / std
    mask = (deviation > k).astype(features.dtype)
    return features * mask, mask


def _check(B, S, F, key, target_block_bytes=4 * 1024 * 1024):
    kf, _ = jax.random.split(key)
    features = jax.random.uniform(kf, (B, S, F), dtype=jnp.float32) * 2.0
    noise_mean = jnp.linspace(-1.0, 0.0, F, dtype=jnp.float32)
    noise_std = jnp.full((F,), 0.5, dtype=jnp.float32)

    filtered, mask = log_noise_filter(
        features, noise_mean, noise_std, k=3.0, eps=1e-8,
        target_block_bytes=target_block_bytes)
    jax.block_until_ready((filtered, mask))

    ref_filtered, ref_mask = log_noise_filter_ref(
        features, noise_mean, noise_std, k=3.0, eps=1e-8)

    # Tolerance policy: exp-space thresholding may flip elements lying within
    # ~1 ulp of exp(mean +/- k*std) vs. the log-space reference (strict '>'
    # through rounded exp). Allow a couple of such boundary flips.
    flips = int(jnp.sum(mask != ref_mask))
    assert flips <= 2, f"too many mask boundary flips: {flips}"
    agree = mask == ref_mask
    filt_ok = jnp.where(agree, jnp.isclose(filtered, ref_filtered, atol=1e-6), True)
    assert bool(jnp.all(filt_ok)), "filtered mismatch"

    # Mask-less variant (drops one HBM stream) must agree with the full kernel.
    filt_only = log_noise_filter(
        features, noise_mean, noise_std, k=3.0, eps=1e-8,
        with_mask=False, target_block_bytes=target_block_bytes)
    jax.block_until_ready(filt_only)
    assert bool(jnp.all(filt_only == filtered)), "with_mask=False mismatch"


if __name__ == "__main__":
    key = jax.random.PRNGKey(0)
    k0, k1, k2 = jax.random.split(key, 3)

    # Small shape from the module's forward: [batch, seq_len, num_base_features].
    _check(2, 16, 8, k0)
    # Multi-block grid with a partial last row block (exercises cdiv remainder path).
    _check(3, 2000, 8, k1, target_block_bytes=64 * 1024)
    # Feature count with no lane-dense factorization -> full-dim-lane fallback.
    _check(2, 7, 5, k2)

    print("KERNEL_OK")
</pallas_src>

<mosaic_0001>
module attributes {stable_mosaic.version = 11 : i64} {
  func.func @_log_noise_filter_kernel(%arg0: i32, %arg1: memref<1x256xf32, #tpu.memory_space<vmem>>, %arg2: memref<1x256xf32, #tpu.memory_space<vmem>>, %arg3: memref<1x256xf32, #tpu.memory_space<vmem>>, %arg4: memref<1x256xf32, #tpu.memory_space<vmem>>, %arg5: memref<1x256xf32, #tpu.memory_space<vmem>>) attributes {dimension_semantics = [#tpu.dimension_semantics<parallel>], iteration_bounds = array<i64: 1>, scalar_prefetch = 0 : i64, scratch_operands = 0 : i64, tpu.core_type = #tpu.core_type<tc>, window_params = [{transform_indices = @transform_0, window_bounds = array<i64: 1, 256>}, {pipeline_mode = #tpu.pipeline_mode<synchronous>, transform_indices = @transform_1, window_bounds = array<i64: 1, 256>}, {pipeline_mode = #tpu.pipeline_mode<synchronous>, transform_indices = @transform_2, window_bounds = array<i64: 1, 256>}, {transform_indices = @transform_3, window_bounds = array<i64: 1, 256>}, {transform_indices = @transform_4, window_bounds = array<i64: 1, 256>}]} {
    %c0 = arith.constant 0 : index
    %c0_0 = arith.constant 0 : index
    %0 = vector.load %arg1[%c0, %c0_0] : memref<1x256xf32, #tpu.memory_space<vmem>>, vector<1x256xf32>
    %cst = arith.constant 9.99999993E-9 : f32
    %1 = vector.broadcast %cst : f32 to vector<1x256xf32>
    %2 = arith.maximumf %0, %1 : vector<1x256xf32>
    %c0_1 = arith.constant 0 : index
    %c0_2 = arith.constant 0 : index
    %3 = vector.load %arg2[%c0_1, %c0_2] : memref<1x256xf32, #tpu.memory_space<vmem>>, vector<1x256xf32>
    %4 = arith.cmpf olt, %2, %3 : vector<1x256xf32>
    %c0_3 = arith.constant 0 : index
    %c0_4 = arith.constant 0 : index
    %5 = vector.load %arg3[%c0_3, %c0_4] : memref<1x256xf32, #tpu.memory_space<vmem>>, vector<1x256xf32>
    %6 = arith.cmpf ogt, %2, %5 : vector<1x256xf32>
    %7 = arith.ori %4, %6 : vector<1x256xi1>
    %8 = arith.extui %7 : vector<1x256xi1> to vector<1x256xi32>
    %9 = arith.sitofp %8 : vector<1x256xi32> to vector<1x256xf32>
    %10 = arith.mulf %0, %9 : vector<1x256xf32>
    %c0_5 = arith.constant 0 : index
    %c0_6 = arith.constant 0 : index
    %11 = vector.load %arg4[%c0_5, %c0_6] : memref<1x256xf32, #tpu.memory_space<vmem>>, vector<1x256xf32>
    tpu.vector_store %arg4[%c0_5, %c0_6], %10 {strides = array<i32>} : memref<1x256xf32, #tpu.memory_space<vmem>>, vector<1x256xf32>,
    %12 = arith.extui %7 : vector<1x256xi1> to vector<1x256xi32>
    %13 = arith.sitofp %12 : vector<1x256xi32> to vector<1x256xf32>
    %c0_7 = arith.constant 0 : index
    %c0_8 = arith.constant 0 : index
    %14 = vector.load %arg5[%c0_7, %c0_8] : memref<1x256xf32, #tpu.memory_space<vmem>>, vector<1x256xf32>
    tpu.vector_store %arg5[%c0_7, %c0_8], %13 {strides = array<i32>} : memref<1x256xf32, #tpu.memory_space<vmem>>, vector<1x256xf32>,
    return
  }
  func.func @transform_0(%arg0: i32) -> (i32, i32) {
    %c0_i32 = arith.constant 0 : i32
    %c0_i32_0 = arith.constant 0 : i32
    return %arg0, %c0_i32 : i32, i32
  }
  func.func @transform_1(%arg0: i32) -> (i32, i32) {
    %c0_i32 = arith.constant 0 : i32
    %c0_i32_0 = arith.constant 0 : i32
    %c0_i32_1 = arith.constant 0 : i32
    return %c0_i32, %c0_i32_0 : i32, i32
  }
  func.func @transform_2(%arg0: i32) -> (i32, i32) {
    %c0_i32 = arith.constant 0 : i32
    %c0_i32_0 = arith.constant 0 : i32
    %c0_i32_1 = arith.constant 0 : i32
    return %c0_i32, %c0_i32_0 : i32, i32
  }
  func.func @transform_3(%arg0: i32) -> (i32, i32) {
    %c0_i32 = arith.constant 0 : i32
    %c0_i32_0 = arith.constant 0 : i32
    return %arg0, %c0_i32 : i32, i32
  }
  func.func @transform_4(%arg0: i32) -> (i32, i32) {
    %c0_i32 = arith.constant 0 : i32
    %c0_i32_0 = arith.constant 0 : i32
    return %arg0, %c0_i32 : i32, i32
  }
}

</mosaic_0001>

<llo_original>
// kernel: tpu_custom_call.1
$region0: #{tpu_custom_call.1}
  #allocation0 [shape = 'u32[]', space=smem, size = 0x4, offset = 0x4, fixed_abs, tag = 'smem constant byte address 0x4 - core index']
  #allocation1 [shape = 'u32[144,128]{1,0:T(1,128)}', space=vmem, size = 0x12000, scoped, tag = 'internal scratch']
  %s0 = inlined_call_operand.hbm [shape: f32[1,256], index: 0, kind: input, shape index: {}]
  %s1 = inlined_call_operand.vmem [shape: f32[1,256], index: 1, kind: input, shape index: {}]
  %s2 = inlined_call_operand.vmem [shape: f32[1,256], index: 2, kind: input, shape index: {}]
  %s3 = inlined_call_operand.hbm [shape: f32[1,256], index: 3, kind: output, shape index: {0}]
  %s4 = inlined_call_operand.hbm [shape: f32[1,256], index: 4, kind: output, shape index: {1}]
  %5 = xla_tuple %s3, %s4
  %s6 = sld [smem:[#allocation0]]
  $region34: #{tpu_custom_call.1} parent=0
    _
  %s8 = ssub.s32 1, %s6
  %s9 = scalar_select 0, %s8, %s6
  $region1: #{tpu_custom_call.1} parent=0
    #allocation2 [shape = 'u8[1024]{0}', space=vmem, size = 0x400, scoped, tag = 'input window, operand 0, single buffered']
    #allocation3 [shape = 's32[1]{0}', space=sflag, size = 0x4, scoped, tag = 'scoped memory for tpu_custom_call.1']
    #allocation4 [shape = 's32[1]{0}', space=sflag, size = 0x4, scoped, tag = 'scoped memory for tpu_custom_call.1']
    #allocation5 [shape = 'u8[1024]{0}', space=vmem, size = 0x400, scoped, tag = 'output window, operand 0, single buffered']
    #allocation6 [shape = 'u8[1024]{0}', space=vmem, size = 0x400, scoped, tag = 'output window, operand 1, single buffered']
    #allocation7 [shape = 's32[1]{0}', space=sflag, size = 0x4, scoped, tag = 'scoped memory for tpu_custom_call.1']
    %10 = vsyncpa [#allocation3], 0
    %11 = vsyncpa [#allocation4], 0
    %12 = vsyncpa [#allocation7], 0
    // Predicated region
    $region2: #{tpu_custom_call.1} parent=1 // pred_check
      _
    $region3: #{tpu_custom_call.1} parent=1 // pred_check_branch
      %14 = sbr.rel (0) target = $region5
    $region4: #{tpu_custom_call.1} parent=1 // pred_region
      %s16 = ssub.s32 32, 32
      %17 = vsyncadd [#allocation3], %s16
      %s19 = sshll.u32 [#allocation2], 4
      %s20 = int_to_ptr.vmem [resolvable:$true] %s19
      %22 = dma.hbm_to_vmem [thread:$0]  %s0, 32, %s20, [#allocation3]
    $region5: #{tpu_custom_call.1} parent=1 // pred_fallthru
      _
    // Predicated region
    $region6: #{tpu_custom_call.1} parent=1 // pred_check
      _
    $region7: #{tpu_custom_call.1} parent=1 // pred_check_branch
      %24 = sbr.rel (0) target = $region9
    $region8: #{tpu_custom_call.1} parent=1 // pred_region
      _
    $region9: #{tpu_custom_call.1} parent=1 // pred_fallthru
      _
    // Predicated region
    $region10: #{tpu_custom_call.1} parent=1 // pred_check
      _
    $region11: #{tpu_custom_call.1} parent=1 // pred_check_branch
      %26 = sbr.rel (0) target = $region13
    $region12: #{tpu_custom_call.1} parent=1 // pred_region
      _
    $region13: #{tpu_custom_call.1} parent=1 // pred_fallthru
      _
    // Predicated region
    $region14: #{tpu_custom_call.1} parent=1 // pred_check
      _
    $region15: #{tpu_custom_call.1} parent=1 // pred_check_branch
      %28 = sbr.rel (0) target = $region17
    $region16: #{tpu_custom_call.1} parent=1 // pred_region
      %29 = dma.done [#allocation3], 32
    $region17: #{tpu_custom_call.1} parent=1 // pred_fallthru
      _
    %v30 = vld [vmem:[#allocation2] sm:$0x3]
    %v31 = vmax.f32 %v30, 1e-08
    %v32 = vld [vmem:[%s1] sm:$0x3]
    %vm33 = vcmp.lt.f32.partialorder %v31, %v32
    %v34 = vld [vmem:[%s2] sm:$0x3]
    %vm35 = vcmp.gt.f32.partialorder %v31, %v34
    %vm36 = vmor %vm33, %vm35
    %v37 = vsel %vm36, 1, 0
    %v38 = vcvt.s32.f32 %v37
    %v39 = vmul.f32 %v30, %v38
    %v40 = vlaneseq
    %vm41 = vcmp.ge.s32.totalorder %v40, 0
    %vm42 = vcmp.lt.s32.totalorder %v40, 256
    %vm43 = vmand %vm41, %vm42
    %44 = vst.msk [vmem:[#allocation5] sm:$0x3] %vm43, %v39
    %45 = vst.msk [vmem:[#allocation6] sm:$0x3] %vm43, %v38
    // Predicated region
    $region18: #{tpu_custom_call.1} parent=1 // pred_check
      _
    $region19: #{tpu_custom_call.1} parent=1 // pred_check_branch
      %47 = sbr.rel (0) target = $region21
    $region20: #{tpu_custom_call.1} parent=1 // pred_region
      %s49 = ssub.s32 32, 32
      %50 = vsyncadd [#allocation4], %s49
      %s52 = sshll.u32 [#allocation5], 4
      %s53 = int_to_ptr.vmem [resolvable:$true] %s52
      %55 = dma.vmem_to_hbm [thread:$0]  %s53, 32, %s3, [#allocation4]
    $region21: #{tpu_custom_call.1} parent=1 // pred_fallthru
      _
    // Predicated region
    $region22: #{tpu_custom_call.1} parent=1 // pred_check
      _
    $region23: #{tpu_custom_call.1} parent=1 // pred_check_branch
      %57 = sbr.rel (0) target = $region25
    $region24: #{tpu_custom_call.1} parent=1 // pred_region
      %s59 = ssub.s32 32, 32
      %60 = vsyncadd [#allocation7], %s59
      %s62 = sshll.u32 [#allocation6], 4
      %s63 = int_to_ptr.vmem [resolvable:$true] %s62
      %65 = dma.vmem_to_hbm [thread:$0]  %s63, 32, %s4, [#allocation7]
    $region25: #{tpu_custom_call.1} parent=1 // pred_fallthru
      _
    // Predicated region
    $region26: #{tpu_custom_call.1} parent=1 // pred_check
      _
    $region27: #{tpu_custom_call.1} parent=1 // pred_check_branch
      %67 = sbr.rel (0) target = $region29
    $region28: #{tpu_custom_call.1} parent=1 // pred_region
      %68 = dma.done [#allocation4], 32
    $region29: #{tpu_custom_call.1} parent=1 // pred_fallthru
      _
    // Predicated region
    $region30: #{tpu_custom_call.1} parent=1 // pred_check
      _
    $region31: #{tpu_custom_call.1} parent=1 // pred_check_branch
      %70 = sbr.rel (0) target = $region33
    $region32: #{tpu_custom_call.1} parent=1 // pred_region
      %71 = dma.done [#allocation7], 32
    $region33: #{tpu_custom_call.1} parent=1 // pred_fallthru
      _
    %72 = vsyncpa [#allocation3], 1
    %73 = vsyncpa [#allocation4], 1
    %74 = vsyncpa [#allocation7], 1

</llo_original>
